<compile_context>
chip_gen: v7x
topology: tpu7x:2x2x1
jax: 0.10.0
libtpu: 0.0.40
codegen_flags: <defaults>
</compile_context>

<pallas_src>
import functools

import jax
import jax.numpy as jnp
from jax.experimental import pallas as pl
from jax.experimental.pallas import tpu as pltpu

NUM_STACKS = 3   # ARMAConv(num_stacks=3)
NUM_LAYERS = 3   # ARMA_Net.num_layers = 3 (T iterations inside each ARMAConv)
PAD = 128        # lane padding for all fused feature slabs


# ----------------------------------------------------------------------------
# Pallas kernel: full forward pass in one call
# ----------------------------------------------------------------------------
def arma_net_kernel(x_ref, a_hbm_ref, w_ref, b_ref, o_ref, a_vmem, dma_sem,
                    *, num_iters, num_classes):
    f32, bf16 = jnp.float32, jnp.bfloat16

    # A_hat: one manual, single-buffered DMA.  grid=(1,) can never pipeline
    # this block, so the default BlockSpec double-buffer would only waste
    # VMEM; single-buffering keeps the full adjacency resident at ~2x the N
    # that double-buffering would allow (v7x: 64 MiB physical VMEM).
    cp = pltpu.make_async_copy(a_hbm_ref, a_vmem, dma_sem)
    cp.start()
    cp.wait()
    a_hat = a_vmem[...]                    # [N, N]     bf16

    x = x_ref[...]                         # [N, 128]   bf16 (feature lanes padded)
    proj1 = w_ref[0:PAD, :]                # [128, 256] bf16 = [iw1 || rw1]
    proj2 = w_ref[PAD:2 * PAD, :]          # [128, 256] bf16 = [m1@iw2 || m1@rw2]
    wbd = w_ref[2 * PAD:3 * PAD, :]        # [128, 256] bf16 = [wbd1 || wbd2]
    biases = b_ref[...]                    # [2, 128]   f32

    def arma_layer(h_bf, proj, w_shared, bias_row):
        """One ARMAConv layer, all K stacks fused along the lane axis.

        Returns the pre-mean per-stack outputs [N, 128] f32 (stack k occupies
        lanes [k*f_out, (k+1)*f_out)); every lane is >= 0.
        """
        # init + root projections as a single 256-lane MXU pass, split at the
        # 128-lane boundary (layout-free).
        pr = jnp.dot(h_bf, proj, preferred_element_type=f32)       # [N, 256]
        out = pr[:, :PAD]
        root = pr[:, PAD:] + bias_row                              # dropout = id (eval)
        for t in range(num_iters):
            if t > 0:
                out = jnp.dot(out.astype(bf16), w_shared,
                              preferred_element_type=f32)          # shared W (block-diag)
            out = jnp.dot(a_hat, out.astype(bf16),
                          preferred_element_type=f32)              # propagate
            out = jnp.maximum(out + root, 0.0)                     # ARMA activation
        return out

    out1 = arma_layer(x, proj1, wbd[:, :PAD], biases[0:1, :])
    # conv1's 1/K stack mean is folded into proj2; the outer F.relu is a no-op
    # because out1 >= 0 lane-wise.
    out2 = arma_layer(out1.astype(bf16), proj2, wbd[:, PAD:], biases[1:2, :])

    # conv2 stack mean: sum lane blocks [0:C), [C:2C), [2C:3C) into lanes
    # [0:C) with cyclic lane rolls (XLU) + adds (VPU) -- no f32 matmul.
    # Rolls are issued with positive shifts in BOTH directions: whichever
    # direction is "wrong" only pulls in lanes >= PAD - 2C, which are
    # identically zero, so the first C lanes of `summed` are exact regardless
    # of the roll sign convention.
    c = num_classes
    summed = out2
    for sh in (c, 2 * c):
        summed = summed + pltpu.roll(out2, shift=sh, axis=1)
        summed = summed + pltpu.roll(out2, shift=PAD - sh, axis=1)
    mean = summed * (1.0 / NUM_STACKS)

    # masked log_softmax over the first num_classes lanes (rest is junk/pad)
    lane = jax.lax.broadcasted_iota(jnp.int32, mean.shape, 1)
    valid = lane < num_classes
    logits = jnp.where(valid, mean, -1e30)
    mx = jnp.max(logits, axis=-1, keepdims=True)
    s = logits - mx
    denom = jnp.sum(jnp.where(valid, jnp.exp(s), 0.0), axis=-1, keepdims=True)
    o_ref[...] = s - jnp.log(denom)


# ----------------------------------------------------------------------------
# Wrapper
# ----------------------------------------------------------------------------
def arma_net_forward(x_pad_bf, a_hat_bf, wslab, biases, num_classes):
    """Fused conv1 -> conv2 -> log_softmax.  Returns [N, num_classes] f32.

    x_pad_bf: [N, 128] bf16 (features in the first F_in lanes, rest zero)
    a_hat_bf: [N, N]   bf16 (dense normalized adjacency)
    wslab:    [384, 256] bf16 and biases: [2, 128] f32 (see pack_model).
    """
    n = x_pad_bf.shape[0]
    assert 5 * num_classes <= PAD  # roll-based stack mean needs zero top lanes

    kernel = functools.partial(arma_net_kernel,
                               num_iters=NUM_LAYERS, num_classes=num_classes)

    flops = int(
        2 * (2 * n * PAD * 2 * PAD)                    # fused init||root projections
        + 2 * NUM_LAYERS * (2 * n * n * PAD)           # A_hat propagates
        + 2 * (NUM_LAYERS - 1) * (2 * n * PAD * PAD))  # shared-W block-diag matmuls
    bytes_accessed = int(x_pad_bf.size * 2 + a_hat_bf.size * 2
                         + wslab.size * 2 + biases.size * 4 + n * PAD * 4)

    out_padded = pl.pallas_call(
        kernel,
        out_shape=jax.ShapeDtypeStruct((n, PAD), jnp.float32),
        grid=(1,),
        in_specs=[
            pl.BlockSpec((n, PAD), lambda i: (0, 0)),       # x (bf16, lane-padded)
            pl.BlockSpec(memory_space=pl.ANY),              # A_hat stays in HBM
            pl.BlockSpec(wslab.shape, lambda i: (0, 0)),    # fused bf16 weight slab
            pl.BlockSpec(biases.shape, lambda i: (0, 0)),   # f32 biases
        ],
        out_specs=pl.BlockSpec((n, PAD), lambda i: (0, 0)),  # lane-dense store
        scratch_shapes=[
            pltpu.VMEM(a_hat_bf.shape, jnp.bfloat16),       # single-buffered A_hat
            pltpu.SemaphoreType.DMA(()),
        ],
        compiler_params=pltpu.CompilerParams(
            dimension_semantics=("arbitrary",),
            vmem_limit_bytes=32 * 1024 * 1024,
        ),
        cost_estimate=pl.CostEstimate(
            flops=flops,
            transcendentals=int(n * PAD + n),
            bytes_accessed=bytes_accessed),
        # TODO(synk): at large N, row-tile A_hat / the node axis with a
        # "parallel" grid dimension (2x on v7x's two TensorCores) and batch
        # multiple graphs into one call instead of calling per graph.
    )(x_pad_bf, a_hat_bf, wslab, biases)
    return out_padded[:, :num_classes]


# ----------------------------------------------------------------------------
# Parameter packing: everything fused into one bf16 slab + one f32 bias array
# ----------------------------------------------------------------------------
def _stack_proj(weights, in_rows=PAD, pad=PAD):
    """[K, f_in, f_out] -> [in_rows, pad]; stack k in lanes [k*f_out, (k+1)*f_out)."""
    k, f_in, f_out = weights.shape
    wide = k * f_out
    return jnp.zeros((in_rows, pad), jnp.float32).at[:f_in, :wide].set(
        jnp.concatenate(list(weights), axis=1))


def _block_diag(w, pad=PAD):
    k, f, _ = w.shape
    out = jnp.zeros((pad, pad), jnp.float32)
    for i in range(k):
        out = out.at[i * f:(i + 1) * f, i * f:(i + 1) * f].set(w[i])
    return out


def _mean_matrix(k, f, pad=PAD):
    m = jnp.zeros((pad, pad), jnp.float32)
    eye = jnp.eye(f, dtype=jnp.float32) / k
    for i in range(k):
        m = m.at[i * f:(i + 1) * f, :f].set(eye)
    return m


def _stack_bias(bias, pad=PAD):
    k, _, f_out = bias.shape
    wide = k * f_out
    return jnp.zeros((pad,), jnp.float32).at[:wide].set(
        jnp.concatenate([bias[i, 0] for i in range(k)]))


def pack_model(params):
    """Fuse all weights into one bf16 row-stacked slab + one f32 bias array.

    wslab rows [0:128)   = [iw1 || rw1]            conv1 init/root projections
          rows [128:256) = [m1 @ iw2 || m1 @ rw2]  conv1 stack-mean folded in
          rows [256:384) = [wbd1 || wbd2]          block-diag shared weights
    biases row 0 = conv1 bias (lanes 0:K*f_out1), row 1 = conv2 bias.
    """
    iw1, w1, rw1, b1 = params["conv1"]
    iw2, w2, rw2, b2 = params["conv2"]
    k1, _, f_out1 = iw1.shape

    proj1 = jnp.concatenate([_stack_proj(iw1), _stack_proj(rw1)], axis=1)
    # Fold conv1's 1/K stack mean into conv2's projections (f32, at pack time).
    m1 = _mean_matrix(k1, f_out1)
    proj2 = jnp.concatenate([m1 @ _stack_proj(iw2), m1 @ _stack_proj(rw2)], axis=1)
    wbd = jnp.concatenate([_block_diag(w1), _block_diag(w2)], axis=1)

    wslab = jnp.concatenate([proj1, proj2, wbd], axis=0).astype(jnp.bfloat16)
    biases = jnp.stack([_stack_bias(b1), _stack_bias(b2)], axis=0)  # [2, 128] f32
    return wslab, biases


def prepare_inputs(x, a_hat):
    """Pad/cast the graph inputs to bf16 once (cached across forward calls)."""
    n, f_in = x.shape
    x_pad = jnp.zeros((n, PAD), jnp.float32).at[:, :f_in].set(x)
    return x_pad.astype(jnp.bfloat16), a_hat.astype(jnp.bfloat16)


# ----------------------------------------------------------------------------
# Pure-JAX reference with the same bf16-operand / f32-accumulate numerics
# ----------------------------------------------------------------------------
def arma_conv_ref(x, a_hat_bf, init_w, w, root_w, bias, num_iters):
    bf16, f32 = jnp.bfloat16, jnp.float32
    xb = x.astype(bf16)
    outs = []
    for k in range(init_w.shape[0]):
        root = jnp.dot(xb, root_w[k].astype(bf16),
                       preferred_element_type=f32) + bias[k]
        out = jnp.dot(xb, init_w[k].astype(bf16), preferred_element_type=f32)
        for t in range(num_iters):
            if t > 0:
                out = jnp.dot(out.astype(bf16), w[k].astype(bf16),
                              preferred_element_type=f32)
            out = jnp.dot(a_hat_bf, out.astype(bf16), preferred_element_type=f32)
            out = jnp.maximum(out + root, 0.0)
        outs.append(out)
    return jnp.mean(jnp.stack(outs, 0), axis=0)


def arma_net_ref(x, a_hat, params, num_iters):
    a_hat_bf = a_hat.astype(jnp.bfloat16)
    h = jnp.maximum(arma_conv_ref(x, a_hat_bf, *params["conv1"], num_iters), 0.0)
    h = jnp.maximum(arma_conv_ref(h, a_hat_bf, *params["conv2"], num_iters), 0.0)
    return jax.nn.log_softmax(h, axis=1)


# ----------------------------------------------------------------------------
# Setup helpers
# ----------------------------------------------------------------------------
def glorot(key, shape):
    fan_in, fan_out = shape[-2], shape[-1]
    lim = jnp.sqrt(6.0 / (fan_in + fan_out))
    return jax.random.uniform(key, shape, jnp.float32, -lim, lim)


def make_arma_params(key, f_in, f_out, k_stacks):
    k1, k2, k3, k4 = jax.random.split(key, 4)
    init_w = glorot(k1, (k_stacks, f_in, f_out))
    w = glorot(k2, (k_stacks, f_out, f_out))       # shared_weights=True -> one set
    root_w = glorot(k3, (k_stacks, f_in, f_out))
    bias = 0.1 * jax.random.normal(k4, (k_stacks, 1, f_out), jnp.float32)
    return (init_w, w, root_w, bias)


def build_normalized_adjacency(key, n):
    """Dense gcn_norm(A) with add_self_loops=False: D^-1/2 A D^-1/2."""
    src = jnp.arange(n)
    dst = (src + 1) % n
    extra_src = jax.random.randint(key, (n,), 0, n)
    extra_dst = (extra_src + 3) % n
    rows = jnp.concatenate([src, dst, extra_src, extra_dst])
    cols = jnp.concatenate([dst, src, extra_dst, extra_src])
    adj = jnp.zeros((n, n), jnp.float32).at[rows, cols].set(1.0)
    deg = jnp.sum(adj, axis=1)
    dinv = jnp.where(deg > 0, 1.0 / jnp.sqrt(deg), 0.0)
    return dinv[:, None] * adj * dinv[None, :]


# ----------------------------------------------------------------------------
if __name__ == "__main__":
    N = 16            # nodes
    F_IN = 8          # data.num_features
    LAYER_SIZE = (32, 32)
    NUM_CLASSES = 4   # int(data.y.max() + 1)

    root_key = jax.random.PRNGKey(0)
    kx, ka, kc1, kc2 = jax.random.split(root_key, 4)

    x = jax.random.normal(kx, (N, F_IN), jnp.float32)          # data.x
    a_hat = build_normalized_adjacency(ka, N)                   # dense gcn_norm(edge_index)

    params = {
        "conv1": make_arma_params(kc1, F_IN, LAYER_SIZE[0], NUM_STACKS),
        "conv2": make_arma_params(kc2, LAYER_SIZE[1], NUM_CLASSES, NUM_STACKS),
    }
    wslab, biases = pack_model(params)
    x_pad_bf, a_hat_bf = prepare_inputs(x, a_hat)   # pre-cast/pad once, reused

    out = arma_net_forward(x_pad_bf, a_hat_bf, wslab, biases, NUM_CLASSES)
    jax.block_until_ready(out)

    ref = arma_net_ref(x, a_hat, params, NUM_LAYERS)
    assert out.shape == (N, NUM_CLASSES)
    assert bool(jnp.all(jnp.isfinite(out)))
    # Tolerance covers the bf16 rounding of the folded (m1 @ iw2/rw2) weights
    # vs. the reference's mean-then-cast path; a wrong mean/fold would be O(1).
    assert jnp.allclose(out, ref, atol=3e-2, rtol=3e-2), "mismatch vs reference"

    print("KERNEL_OK")
</pallas_src>

<mosaic_0001>
module attributes {stable_mosaic.version = 11 : i64} {
  func.func @arma_net_kernel(%arg0: i32, %arg1: memref<16x128xbf16, #tpu.memory_space<vmem>>, %arg2: memref<16x16xbf16, #tpu.memory_space<any>>, %arg3: memref<384x256xbf16, #tpu.memory_space<vmem>>, %arg4: memref<2x128xf32, #tpu.memory_space<vmem>>, %arg5: memref<16x128xf32, #tpu.memory_space<vmem>>, %arg6: memref<16x16xbf16, #tpu.memory_space<vmem>>, %arg7: memref<!tpu.dma_semaphore, #tpu.memory_space<semaphore_mem>>) attributes {dimension_semantics = [#tpu.dimension_semantics<arbitrary>], iteration_bounds = array<i64: 1>, scalar_prefetch = 0 : i64, scratch_operands = 2 : i64, tpu.core_type = #tpu.core_type<tc>, window_params = [{pipeline_mode = #tpu.pipeline_mode<synchronous>, transform_indices = @transform_0, window_bounds = array<i64: 16, 128>}, {}, {pipeline_mode = #tpu.pipeline_mode<synchronous>, transform_indices = @transform_2, window_bounds = array<i64: 384, 256>}, {pipeline_mode = #tpu.pipeline_mode<synchronous>, transform_indices = @transform_3, window_bounds = array<i64: 2, 128>}, {pipeline_mode = #tpu.pipeline_mode<synchronous>, transform_indices = @transform_4, window_bounds = array<i64: 16, 128>}]} {
    tpu.enqueue_dma source(%arg2 : memref<16x16xbf16, #tpu.memory_space<any>>) target(%arg6 : memref<16x16xbf16, #tpu.memory_space<vmem>>) target_semaphore(%arg7 : memref<!tpu.dma_semaphore, #tpu.memory_space<semaphore_mem>>)
    tpu.wait_dma2 semaphore(%arg7 : memref<!tpu.dma_semaphore, #tpu.memory_space<semaphore_mem>>) src(%arg2 : memref<16x16xbf16, #tpu.memory_space<any>>) dst(%arg6 : memref<16x16xbf16, #tpu.memory_space<vmem>>)
    %c0 = arith.constant 0 : index
    %c0_0 = arith.constant 0 : index
    %0 = vector.load %arg6[%c0, %c0_0] : memref<16x16xbf16, #tpu.memory_space<vmem>>, vector<16x16xbf16>
    %c0_1 = arith.constant 0 : index
    %c0_2 = arith.constant 0 : index
    %1 = vector.load %arg1[%c0_1, %c0_2] : memref<16x128xbf16, #tpu.memory_space<vmem>>, vector<16x128xbf16>
    %c0_3 = arith.constant 0 : index
    %c0_4 = arith.constant 0 : index
    %2 = vector.load %arg3[%c0_3, %c0_4] : memref<384x256xbf16, #tpu.memory_space<vmem>>, vector<128x256xbf16>
    %c128 = arith.constant 128 : index
    %c0_5 = arith.constant 0 : index
    %3 = vector.load %arg3[%c128, %c0_5] : memref<384x256xbf16, #tpu.memory_space<vmem>>, vector<128x256xbf16>
    %c256 = arith.constant 256 : index
    %c0_6 = arith.constant 0 : index
    %4 = vector.load %arg3[%c256, %c0_6] : memref<384x256xbf16, #tpu.memory_space<vmem>>, vector<128x256xbf16>
    %c0_7 = arith.constant 0 : index
    %c0_8 = arith.constant 0 : index
    %5 = vector.load %arg4[%c0_7, %c0_8] : memref<2x128xf32, #tpu.memory_space<vmem>>, vector<2x128xf32>
    %6 = vector.extract_strided_slice %4 {offsets = [0, 0], sizes = [128, 128], strides = [1, 1]} : vector<128x256xbf16> to vector<128x128xbf16>
    %7 = vector.extract_strided_slice %5 {offsets = [0, 0], sizes = [1, 128], strides = [1, 1]} : vector<2x128xf32> to vector<1x128xf32>
    %cst = arith.constant dense<0.000000e+00> : vector<16x256xf32>
    %8 = tpu.matmul %1, %2, %cst {dimension_numbers = #tpu.dot_dimension_numbers<[1], [0], [0], [1], [0, 0, 1, 1], [], []>} : vector<16x128xbf16>, vector<128x256xbf16>, vector<16x256xf32> -> vector<16x256xf32>
    %9 = vector.extract_strided_slice %8 {offsets = [0, 0], sizes = [16, 128], strides = [1, 1]} : vector<16x256xf32> to vector<16x128xf32>
    %10 = vector.extract_strided_slice %8 {offsets = [0, 128], sizes = [16, 128], strides = [1, 1]} : vector<16x256xf32> to vector<16x128xf32>
    %11 = vector.broadcast %7 : vector<1x128xf32> to vector<16x128xf32>
    %12 = arith.addf %10, %11 : vector<16x128xf32>
    %13 = arith.truncf %9 : vector<16x128xf32> to vector<16x128xbf16>
    %cst_9 = arith.constant dense<0.000000e+00> : vector<16x128xf32>
    %14 = tpu.matmul %0, %13, %cst_9 {dimension_numbers = #tpu.dot_dimension_numbers<[1], [0], [0], [1], [0, 0, 1, 1], [], []>} : vector<16x16xbf16>, vector<16x128xbf16>, vector<16x128xf32> -> vector<16x128xf32>
    %15 = arith.addf %14, %12 : vector<16x128xf32>
    %cst_10 = arith.constant 0.000000e+00 : f32
    %16 = vector.broadcast %cst_10 : f32 to vector<16x128xf32>
    %17 = arith.maximumf %15, %16 : vector<16x128xf32>
    %18 = arith.truncf %17 : vector<16x128xf32> to vector<16x128xbf16>
    %cst_11 = arith.constant dense<0.000000e+00> : vector<16x128xf32>
    %19 = tpu.matmul %18, %6, %cst_11 {dimension_numbers = #tpu.dot_dimension_numbers<[1], [0], [0], [1], [0, 0, 1, 1], [], []>} : vector<16x128xbf16>, vector<128x128xbf16>, vector<16x128xf32> -> vector<16x128xf32>
    %20 = arith.truncf %19 : vector<16x128xf32> to vector<16x128xbf16>
    %cst_12 = arith.constant dense<0.000000e+00> : vector<16x128xf32>
    %21 = tpu.matmul %0, %20, %cst_12 {dimension_numbers = #tpu.dot_dimension_numbers<[1], [0], [0], [1], [0, 0, 1, 1], [], []>} : vector<16x16xbf16>, vector<16x128xbf16>, vector<16x128xf32> -> vector<16x128xf32>
    %22 = arith.addf %21, %12 : vector<16x128xf32>
    %cst_13 = arith.constant 0.000000e+00 : f32
    %23 = vector.broadcast %cst_13 : f32 to vector<16x128xf32>
    %24 = arith.maximumf %22, %23 : vector<16x128xf32>
    %25 = arith.truncf %24 : vector<16x128xf32> to vector<16x128xbf16>
    %cst_14 = arith.constant dense<0.000000e+00> : vector<16x128xf32>
    %26 = tpu.matmul %25, %6, %cst_14 {dimension_numbers = #tpu.dot_dimension_numbers<[1], [0], [0], [1], [0, 0, 1, 1], [], []>} : vector<16x128xbf16>, vector<128x128xbf16>, vector<16x128xf32> -> vector<16x128xf32>
    %27 = arith.truncf %26 : vector<16x128xf32> to vector<16x128xbf16>
    %cst_15 = arith.constant dense<0.000000e+00> : vector<16x128xf32>
    %28 = tpu.matmul %0, %27, %cst_15 {dimension_numbers = #tpu.dot_dimension_numbers<[1], [0], [0], [1], [0, 0, 1, 1], [], []>} : vector<16x16xbf16>, vector<16x128xbf16>, vector<16x128xf32> -> vector<16x128xf32>
    %29 = arith.addf %28, %12 : vector<16x128xf32>
    %cst_16 = arith.constant 0.000000e+00 : f32
    %30 = vector.broadcast %cst_16 : f32 to vector<16x128xf32>
    %31 = arith.maximumf %29, %30 : vector<16x128xf32>
    %32 = arith.truncf %31 : vector<16x128xf32> to vector<16x128xbf16>
    %33 = vector.extract_strided_slice %4 {offsets = [0, 128], sizes = [128, 128], strides = [1, 1]} : vector<128x256xbf16> to vector<128x128xbf16>
    %34 = vector.extract_strided_slice %5 {offsets = [1, 0], sizes = [1, 128], strides = [1, 1]} : vector<2x128xf32> to vector<1x128xf32>
    %cst_17 = arith.constant dense<0.000000e+00> : vector<16x256xf32>
    %35 = tpu.matmul %32, %3, %cst_17 {dimension_numbers = #tpu.dot_dimension_numbers<[1], [0], [0], [1], [0, 0, 1, 1], [], []>} : vector<16x128xbf16>, vector<128x256xbf16>, vector<16x256xf32> -> vector<16x256xf32>
    %36 = vector.extract_strided_slice %35 {offsets = [0, 0], sizes = [16, 128], strides = [1, 1]} : vector<16x256xf32> to vector<16x128xf32>
    %37 = vector.extract_strided_slice %35 {offsets = [0, 128], sizes = [16, 128], strides = [1, 1]} : vector<16x256xf32> to vector<16x128xf32>
    %38 = vector.broadcast %34 : vector<1x128xf32> to vector<16x128xf32>
    %39 = arith.addf %37, %38 : vector<16x128xf32>
    %40 = arith.truncf %36 : vector<16x128xf32> to vector<16x128xbf16>
    %cst_18 = arith.constant dense<0.000000e+00> : vector<16x128xf32>
    %41 = tpu.matmul %0, %40, %cst_18 {dimension_numbers = #tpu.dot_dimension_numbers<[1], [0], [0], [1], [0, 0, 1, 1], [], []>} : vector<16x16xbf16>, vector<16x128xbf16>, vector<16x128xf32> -> vector<16x128xf32>
    %42 = arith.addf %41, %39 : vector<16x128xf32>
    %cst_19 = arith.constant 0.000000e+00 : f32
    %43 = vector.broadcast %cst_19 : f32 to vector<16x128xf32>
    %44 = arith.maximumf %42, %43 : vector<16x128xf32>
    %45 = arith.truncf %44 : vector<16x128xf32> to vector<16x128xbf16>
    %cst_20 = arith.constant dense<0.000000e+00> : vector<16x128xf32>
    %46 = tpu.matmul %45, %33, %cst_20 {dimension_numbers = #tpu.dot_dimension_numbers<[1], [0], [0], [1], [0, 0, 1, 1], [], []>} : vector<16x128xbf16>, vector<128x128xbf16>, vector<16x128xf32> -> vector<16x128xf32>
    %47 = arith.truncf %46 : vector<16x128xf32> to vector<16x128xbf16>
    %cst_21 = arith.constant dense<0.000000e+00> : vector<16x128xf32>
    %48 = tpu.matmul %0, %47, %cst_21 {dimension_numbers = #tpu.dot_dimension_numbers<[1], [0], [0], [1], [0, 0, 1, 1], [], []>} : vector<16x16xbf16>, vector<16x128xbf16>, vector<16x128xf32> -> vector<16x128xf32>
    %49 = arith.addf %48, %39 : vector<16x128xf32>
    %cst_22 = arith.constant 0.000000e+00 : f32
    %50 = vector.broadcast %cst_22 : f32 to vector<16x128xf32>
    %51 = arith.maximumf %49, %50 : vector<16x128xf32>
    %52 = arith.truncf %51 : vector<16x128xf32> to vector<16x128xbf16>
    %cst_23 = arith.constant dense<0.000000e+00> : vector<16x128xf32>
    %53 = tpu.matmul %52, %33, %cst_23 {dimension_numbers = #tpu.dot_dimension_numbers<[1], [0], [0], [1], [0, 0, 1, 1], [], []>} : vector<16x128xbf16>, vector<128x128xbf16>, vector<16x128xf32> -> vector<16x128xf32>
    %54 = arith.truncf %53 : vector<16x128xf32> to vector<16x128xbf16>
    %cst_24 = arith.constant dense<0.000000e+00> : vector<16x128xf32>
    %55 = tpu.matmul %0, %54, %cst_24 {dimension_numbers = #tpu.dot_dimension_numbers<[1], [0], [0], [1], [0, 0, 1, 1], [], []>} : vector<16x16xbf16>, vector<16x128xbf16>, vector<16x128xf32> -> vector<16x128xf32>
    %56 = arith.addf %55, %39 : vector<16x128xf32>
    %cst_25 = arith.constant 0.000000e+00 : f32
    %57 = vector.broadcast %cst_25 : f32 to vector<16x128xf32>
    %58 = arith.maximumf %56, %57 : vector<16x128xf32>
    %c4_i32 = arith.constant 4 : i32
    %59 = tpu.dynamic_rotate %58 by %c4_i32 dim 1 : vector<16x128xf32>, i32 -> vector<16x128xf32>
    %60 = arith.addf %58, %59 : vector<16x128xf32>
    %c124_i32 = arith.constant 124 : i32
    %61 = tpu.dynamic_rotate %58 by %c124_i32 dim 1 : vector<16x128xf32>, i32 -> vector<16x128xf32>
    %62 = arith.addf %60, %61 : vector<16x128xf32>
    %c8_i32 = arith.constant 8 : i32
    %63 = tpu.dynamic_rotate %58 by %c8_i32 dim 1 : vector<16x128xf32>, i32 -> vector<16x128xf32>
    %64 = arith.addf %62, %63 : vector<16x128xf32>
    %c120_i32 = arith.constant 120 : i32
    %65 = tpu.dynamic_rotate %58 by %c120_i32 dim 1 : vector<16x128xf32>, i32 -> vector<16x128xf32>
    %66 = arith.addf %64, %65 : vector<16x128xf32>
    %cst_26 = arith.constant 0.333333343 : f32
    %67 = vector.broadcast %cst_26 : f32 to vector<16x128xf32>
    %68 = arith.mulf %66, %67 : vector<16x128xf32>
    %69 = tpu.iota {dimensions = array<i32: 1>} : vector<16x128xi32>
    %c4_i32_27 = arith.constant 4 : i32
    %70 = vector.broadcast %c4_i32_27 : i32 to vector<16x128xi32>
    %71 = arith.cmpi slt, %69, %70 : vector<16x128xi32>
    %cst_28 = arith.constant -1.000000e+30 : f32
    %72 = vector.broadcast %cst_28 : f32 to vector<16x128xf32>
    %73 = arith.select %71, %68, %72 : vector<16x128xi1>, vector<16x128xf32>
    %cst_29 = arith.constant dense<0xFF800000> : vector<16xf32>
    %74 = vector.multi_reduction <maximumf>, %73, %cst_29 [1] : vector<16x128xf32> to vector<16xf32>
    %75 = vector.shape_cast %74 : vector<16xf32> to vector<16x1xf32>
    %76 = vector.broadcast %75 : vector<16x1xf32> to vector<16x128xf32>
    %77 = arith.subf %73, %76 : vector<16x128xf32>
    %78 = math.exp %77 : vector<16x128xf32>
    %cst_30 = arith.constant 0.000000e+00 : f32
    %79 = vector.broadcast %cst_30 : f32 to vector<16x128xf32>
    %80 = arith.select %71, %78, %79 : vector<16x128xi1>, vector<16x128xf32>
    %cst_31 = arith.constant dense<0.000000e+00> : vector<16xf32>
    %81 = vector.multi_reduction <add>, %80, %cst_31 [1] : vector<16x128xf32> to vector<16xf32>
    %82 = vector.shape_cast %81 : vector<16xf32> to vector<16x1xf32>
    %83 = math.log %82 : vector<16x1xf32>
    %84 = vector.broadcast %83 : vector<16x1xf32> to vector<16x128xf32>
    %85 = arith.subf %77, %84 : vector<16x128xf32>
    %c0_32 = arith.constant 0 : index
    %c0_33 = arith.constant 0 : index
    %86 = vector.load %arg5[%c0_32, %c0_33] : memref<16x128xf32, #tpu.memory_space<vmem>>, vector<16x128xf32>
    tpu.vector_store %arg5[%c0_32, %c0_33], %85 {strides = array<i32>} : memref<16x128xf32, #tpu.memory_space<vmem>>, vector<16x128xf32>,
    return
  }
  func.func @transform_0(%arg0: i32) -> (i32, i32) {
    %c0_i32 = arith.constant 0 : i32
    %c0_i32_0 = arith.constant 0 : i32
    %c0_i32_1 = arith.constant 0 : i32
    return %c0_i32, %c0_i32_0 : i32, i32
  }
  func.func @transform_2(%arg0: i32) -> (i32, i32) {
    %c0_i32 = arith.constant 0 : i32
    %c0_i32_0 = arith.constant 0 : i32
    %c0_i32_1 = arith.constant 0 : i32
    return %c0_i32, %c0_i32_0 : i32, i32
  }
  func.func @transform_3(%arg0: i32) -> (i32, i32) {
    %c0_i32 = arith.constant 0 : i32
    %c0_i32_0 = arith.constant 0 : i32
    %c0_i32_1 = arith.constant 0 : i32
    return %c0_i32, %c0_i32_0 : i32, i32
  }
  func.func @transform_4(%arg0: i32) -> (i32, i32) {
    %c0_i32 = arith.constant 0 : i32
    %c0_i32_0 = arith.constant 0 : i32
    %c0_i32_1 = arith.constant 0 : i32
    return %c0_i32, %c0_i32_0 : i32, i32
  }
}

</mosaic_0001>

<llo_original>
// kernel: tpu_custom_call.1
$region0: #{tpu_custom_call.1}
  #allocation0 [shape = 'u32[]', space=smem, size = 0x4, offset = 0x4, fixed_abs, tag = 'smem constant byte address 0x4 - core index']
  #allocation1 [shape = 'u32[144,128]{1,0:T(1,128)}', space=vmem, size = 0x12000, scoped, tag = 'internal scratch']
  #allocation2 [shape = 'bf16[16,16]{1,0:T(16,128)(2,1)}', space=vmem, size = 0x1000, scoped, tag = 'scratch operand']
  #allocation3 [shape = 's32[1]{0}', space=sflag, size = 0x4, scoped, tag = 'scratch operand']
  #allocation10 [shape = 's32[]', space=sflag, size = 0x4, offset = 0, fixed_abs, tag = 'sflag constant byte address 0x0 - dummy sync flag']
  #allocation11 [shape = 's32[]', space=sflag, size = 0x4, offset = 0, fixed_abs, tag = 'sflag constant byte address 0x0 - dummy sync flag']
  #allocation12 [shape = 'u32[]', space=smem, size = 0x4, offset = 0x44, fixed_abs, tag = 'smem constant byte address 0x44 - assertion arg 0']
  #allocation13 [shape = 'u32[]', space=smem, size = 0x4, offset = 0x48, fixed_abs, tag = 'smem constant byte address 0x48 - assertion arg 1']
  %s0 = inlined_call_operand.hbm [shape: bf16[16,128], index: 0, kind: input, shape index: {}]
  %s1 = inlined_call_operand.hbm [shape: bf16[16,16], index: 1, kind: input, shape index: {}]
  %s2 = inlined_call_operand.hbm [shape: bf16[384,256], index: 2, kind: input, shape index: {}]
  %s3 = inlined_call_operand.vmem [shape: f32[2,128], index: 3, kind: input, shape index: {}]
  %s4 = inlined_call_operand.hbm [shape: f32[16,128], index: 4, kind: output, shape index: {}]
  %s5 = sld [smem:[#allocation0]]
  $region34: #{tpu_custom_call.1} parent=0
    _
  %s7 = ssub.s32 1, %s5
  %s8 = scalar_select 0, %s7, %s5
  $region1: #{tpu_custom_call.1} parent=0
    #allocation4 [shape = 'u8[4096]{0}', space=vmem, size = 0x1000, scoped, tag = 'input window, operand 0, single buffered']
    #allocation5 [shape = 's32[1]{0}', space=sflag, size = 0x4, scoped, tag = 'scoped memory for tpu_custom_call.1']
    #allocation6 [shape = 's32[1]{0}', space=sflag, size = 0x4, scoped, tag = 'scoped memory for tpu_custom_call.1']
    #allocation7 [shape = 'u8[196608]{0}', space=vmem, size = 0x30000, scoped, tag = 'input window, operand 2, single buffered']
    #allocation8 [shape = 's32[1]{0}', space=sflag, size = 0x4, scoped, tag = 'scoped memory for tpu_custom_call.1']
    #allocation9 [shape = 'u8[8192]{0}', space=vmem, size = 0x2000, scoped, tag = 'output window, operand 0, single buffered']
    %9 = vsyncpa [#allocation5], 0
    %10 = vsyncpa [#allocation8], 0
    %11 = vsyncpa [#allocation6], 0
    // Predicated region
    $region2: #{tpu_custom_call.1} parent=1 // pred_check
      _
    $region3: #{tpu_custom_call.1} parent=1 // pred_check_branch
      %13 = sbr.rel (0) target = $region5
    $region4: #{tpu_custom_call.1} parent=1 // pred_region
      %s15 = ssub.s32 128, 128
      %16 = vsyncadd [#allocation5], %s15
      %s17 = sshll.u32 [#allocation4], 4
      %s18 = int_to_ptr.vmem [resolvable:$true] %s17
      %23 = dma.hbm_to_vmem [thread:$0]  %s0, 128, %s18, [#allocation5], 64, 64, 4
    $region5: #{tpu_custom_call.1} parent=1 // pred_fallthru
      _
    // Predicated region
    $region6: #{tpu_custom_call.1} parent=1 // pred_check
      _
    $region7: #{tpu_custom_call.1} parent=1 // pred_check_branch
      %25 = sbr.rel (0) target = $region9
    $region8: #{tpu_custom_call.1} parent=1 // pred_region
      %s27 = ssub.s32 6144, 6144
      %28 = vsyncadd [#allocation8], %s27
      %s29 = sshll.u32 [#allocation7], 4
      %s30 = int_to_ptr.vmem [resolvable:$true] %s29
      %35 = dma.hbm_to_vmem [thread:$0]  %s2, 6144, %s30, [#allocation8], 128, 128, 8
    $region9: #{tpu_custom_call.1} parent=1 // pred_fallthru
      _
    // Predicated region
    $region10: #{tpu_custom_call.1} parent=1 // pred_check
      _
    $region11: #{tpu_custom_call.1} parent=1 // pred_check_branch
      %37 = sbr.rel (0) target = $region13
    $region12: #{tpu_custom_call.1} parent=1 // pred_region
      _
    $region13: #{tpu_custom_call.1} parent=1 // pred_fallthru
      _
    // Predicated region
    $region14: #{tpu_custom_call.1} parent=1 // pred_check
      _
    $region15: #{tpu_custom_call.1} parent=1 // pred_check_branch
      %39 = sbr.rel (0) target = $region17
    $region16: #{tpu_custom_call.1} parent=1 // pred_region
      %40 = dma.done [#allocation5], 128
    $region17: #{tpu_custom_call.1} parent=1 // pred_fallthru
      _
    // Predicated region
    $region18: #{tpu_custom_call.1} parent=1 // pred_check
      _
    $region19: #{tpu_custom_call.1} parent=1 // pred_check_branch
      %42 = sbr.rel (0) target = $region21
    $region20: #{tpu_custom_call.1} parent=1 // pred_region
      %43 = dma.done [#allocation8], 6144
    $region21: #{tpu_custom_call.1} parent=1 // pred_fallthru
      _
    // Predicated region
    $region22: #{tpu_custom_call.1} parent=1 // pred_check
      _
    $region23: #{tpu_custom_call.1} parent=1 // pred_check_branch
      %46 = sbr.rel target = $region25
    $region24: #{tpu_custom_call.1} parent=1 // pred_region
      %47 = sst [smem:[#allocation12]] [#allocation11]
      %48 = sst [smem:[#allocation13]] [#allocation10]
    $region25: #{tpu_custom_call.1} parent=1 // pred_fallthru
      _
    %50 = shalt.err (0)
    %s52 = sshll.u32 [#allocation2], 4
    %s53 = int_to_ptr.vmem [resolvable:$true] %s52
    %55 = dma.hbm_to_vmem [thread:$0]  %s1, 128, %s53, [#allocation3]
    %s56 = smul.u32 4, 2
    %s57 = smul.u32 %s56, 1
    %s58 = sshll.u32 %s57, 4
    %59 = dma.done [#allocation3], %s58
    %v60 = vld [vmem:[#allocation2] sm:$0xff]
    %v61 = vld [vmem:[#allocation4] sm:$0xf]
    %v62 = vld [vmem:[#allocation4 + $0x4] sm:$0xf]
    %v63 = vld [vmem:[#allocation7] sm:$0xff]
    %v64 = vld [vmem:[#allocation7 + $0x8] sm:$0xff]
    %v65 = vld [vmem:[#allocation7 + $0x10] sm:$0xff]
    %v66 = vld [vmem:[#allocation7 + $0x18] sm:$0xff]
    %v67 = vld [vmem:[#allocation7 + $0x20] sm:$0xff]
    %v68 = vld [vmem:[#allocation7 + $0x28] sm:$0xff]
    %v69 = vld [vmem:[#allocation7 + $0x30] sm:$0xff]
    %v70 = vld [vmem:[#allocation7 + $0x38] sm:$0xff]
    %v71 = vld [vmem:[#allocation7 + $0x40] sm:$0xff]
    %v72 = vld [vmem:[#allocation7 + $0x48] sm:$0xff]
    %v73 = vld [vmem:[#allocation7 + $0x50] sm:$0xff]
    %v74 = vld [vmem:[#allocation7 + $0x58] sm:$0xff]
    %v75 = vld [vmem:[#allocation7 + $0x60] sm:$0xff]
    %v76 = vld [vmem:[#allocation7 + $0x68] sm:$0xff]
    %v77 = vld [vmem:[#allocation7 + $0x70] sm:$0xff]
    %v78 = vld [vmem:[#allocation7 + $0x78] sm:$0xff]
    %v79 = vld [vmem:[#allocation7 + $0x80] sm:$0xff]
    %v80 = vld [vmem:[#allocation7 + $0x88] sm:$0xff]
    %v81 = vld [vmem:[#allocation7 + $0x90] sm:$0xff]
    %v82 = vld [vmem:[#allocation7 + $0x98] sm:$0xff]
    %v83 = vld [vmem:[#allocation7 + $0xa0] sm:$0xff]
    %v84 = vld [vmem:[#allocation7 + $0xa8] sm:$0xff]
    %v85 = vld [vmem:[#allocation7 + $0xb0] sm:$0xff]
    %v86 = vld [vmem:[#allocation7 + $0xb8] sm:$0xff]
    %v87 = vld [vmem:[#allocation7 + $0xc0] sm:$0xff]
    %v88 = vld [vmem:[#allocation7 + $0xc8] sm:$0xff]
    %v89 = vld [vmem:[#allocation7 + $0xd0] sm:$0xff]
    %v90 = vld [vmem:[#allocation7 + $0xd8] sm:$0xff]
    %v91 = vld [vmem:[#allocation7 + $0xe0] sm:$0xff]
    %v92 = vld [vmem:[#allocation7 + $0xe8] sm:$0xff]
    %v93 = vld [vmem:[#allocation7 + $0xf0] sm:$0xff]
    %v94 = vld [vmem:[#allocation7 + $0xf8] sm:$0xff]
    %v95 = vld [vmem:[#allocation7 + $0x100] sm:$0xff]
    %v96 = vld [vmem:[#allocation7 + $0x108] sm:$0xff]
    %v97 = vld [vmem:[#allocation7 + $0x110] sm:$0xff]
    %v98 = vld [vmem:[#allocation7 + $0x118] sm:$0xff]
    %v99 = vld [vmem:[#allocation7 + $0x120] sm:$0xff]
    %v100 = vld [vmem:[#allocation7 + $0x128] sm:$0xff]
    %v101 = vld [vmem:[#allocation7 + $0x130] sm:$0xff]
    %v102 = vld [vmem:[#allocation7 + $0x138] sm:$0xff]
    %v103 = vld [vmem:[#allocation7 + $0x140] sm:$0xff]
    %v104 = vld [vmem:[#allocation7 + $0x148] sm:$0xff]
    %v105 = vld [vmem:[#allocation7 + $0x150] sm:$0xff]
    %v106 = vld [vmem:[#allocation7 + $0x158] sm:$0xff]
    %v107 = vld [vmem:[#allocation7 + $0x160] sm:$0xff]
    %v108 = vld [vmem:[#allocation7 + $0x168] sm:$0xff]
    %v109 = vld [vmem:[#allocation7 + $0x170] sm:$0xff]
    %v110 = vld [vmem:[#allocation7 + $0x178] sm:$0xff]
    %v111 = vld [vmem:[%s3] sm:$0x3]
    %v114 = vunpack.c.l.b16 %v61
    %v115 = vunpack.c.l.b16 %v62
    %v116 = vpack.c.b16 %v115, %v114
    %v134 = vunpack.c.l.b16 %v63
    %v135 = vunpack.c.h.b16 %v63
    %v136 = vunpack.c.l.b16 %v64
    %v137 = vunpack.c.h.b16 %v64
    %v138 = vunpack.c.l.b16 %v65
    %v139 = vunpack.c.h.b16 %v65
    %v140 = vunpack.c.l.b16 %v66
    %v141 = vunpack.c.h.b16 %v66
    %v142 = vunpack.c.l.b16 %v67
    %v143 = vunpack.c.h.b16 %v67
    %v144 = vunpack.c.l.b16 %v68
    %v145 = vunpack.c.h.b16 %v68
    %v146 = vunpack.c.l.b16 %v69
    %v147 = vunpack.c.h.b16 %v69
    %v148 = vunpack.c.l.b16 %v70
    %v149 = vunpack.c.h.b16 %v70
    %v150 = vunpack.c.l.b16 %v71
    %v151 = vunpack.c.h.b16 %v71
    %v152 = vunpack.c.l.b16 %v72
    %v153 = vunpack.c.h.b16 %v72
    %v154 = vunpack.c.l.b16 %v73
    %v155 = vunpack.c.h.b16 %v73
    %v156 = vunpack.c.l.b16 %v74
    %v157 = vunpack.c.h.b16 %v74
    %v158 = vunpack.c.l.b16 %v75
    %v159 = vunpack.c.h.b16 %v75
    %v160 = vunpack.c.l.b16 %v76
    %v161 = vunpack.c.h.b16 %v76
    %v162 = vunpack.c.l.b16 %v77
    %v163 = vunpack.c.h.b16 %v77
    %v164 = vunpack.c.l.b16 %v78
    %v165 = vunpack.c.h.b16 %v78
    %v166 = vpack.c.b16 %v136, %v134
    %v167 = vpack.c.b16 %v137, %v135
    %v168 = vpack.c.b16 %v140, %v138
    %v169 = vpack.c.b16 %v141, %v139
    %v170 = vpack.c.b16 %v144, %v142
    %v171 = vpack.c.b16 %v145, %v143
    %v172 = vpack.c.b16 %v148, %v146
    %v173 = vpack.c.b16 %v149, %v147
    %v174 = vpack.c.b16 %v152, %v150
    %v175 = vpack.c.b16 %v153, %v151
    %v176 = vpack.c.b16 %v156, %v154
    %v177 = vpack.c.b16 %v157, %v155
    %v178 = vpack.c.b16 %v160, %v158
    %v179 = vpack.c.b16 %v161, %v159
    %v180 = vpack.c.b16 %v164, %v162
    %v181 = vpack.c.b16 %v165, %v163
    %198 = vmatprep.subr.bf16.mxu0 %v167
    %199 = vmatpush1.bf16.msra.mxu0 %v166
    %200 = vmatprep.subr.bf16.mxu0 %v169
    %201 = vmatpush1.bf16.msra.mxu0 %v168
    %202 = vmatprep.subr.bf16.mxu0 %v171
    %203 = vmatpush1.bf16.msra.mxu0 %v170
    %204 = vmatprep.subr.bf16.mxu0 %v173
    %205 = vmatpush1.bf16.msra.mxu0 %v172
    %206 = vmatprep.subr.bf16.mxu0 %v175
    %207 = vmatpush1.bf16.msra.mxu0 %v174
    %208 = vmatprep.subr.bf16.mxu0 %v177
    %209 = vmatpush1.bf16.msra.mxu0 %v176
    %210 = vmatprep.subr.bf16.mxu0 %v179
    %211 = vmatpush1.bf16.msra.mxu0 %v178
    %212 = vmatprep.subr.bf16.mxu0 %v181
    %213 = vmatpush1.bf16.msra.mxu0 %v180
    %214 = vmatprep.subr.bf16.mxu0 0
    %215 = vmatpush1.bf16.msra.mxu0 0
    %216 = vmatprep.subr.bf16.mxu0 0
    %217 = vmatpush1.bf16.msra.mxu0 0
    %218 = vmatprep.subr.bf16.mxu0 0
    %219 = vmatpush1.bf16.msra.mxu0 0
    %220 = vmatprep.subr.bf16.mxu0 0
    %221 = vmatpush1.bf16.msra.mxu0 0
    %222 = vmatprep.subr.bf16.mxu0 0
    %223 = vmatpush1.bf16.msra.mxu0 0
    %224 = vmatprep.subr.bf16.mxu0 0
    %225 = vmatpush1.bf16.msra.mxu0 0
    %226 = vmatprep.subr.bf16.mxu0 0
    %227 = vmatpush1.bf16.msra.mxu0 0
    %228 = vmatprep.subr.bf16.mxu0 0
    %229 = vmatpush1.bf16.msra.mxu0 0
    %230 = vmatprep.mubr.bf16.mxu0 0
    %231 = vmatmul.mubr.bf16.gmra.mrb[0].mxu0 %v116
    %v232 = vpop.f32.mrb[0].mxu0
    %v233 = vadd.f32 0.0, %v232
    %v234 = vpop.f32.mrb[0].mxu0
    %v235 = vadd.f32 0.0, %v234
    %v236 = vpop.f32.mrb[0].mxu0
    %v237 = vadd.f32 0.0, %v236
    %v238 = vpop.f32.mrb[0].mxu0
    %v239 = vadd.f32 0.0, %v238
    %240 = vdwg.mxu0
    %v241 = vlaneseq
    %v242 = vshrl.u32 %v241, 7
    %v243 = vsub.s32 0, %v242
    %v244 = vrot.slane %v111, %v243
    %v245 = vadd.f32 %v235, %v244
    %v246 = vadd.f32 %v239, %v244
    %v247 = vpack.c.bf16 %v237, %v233
    %vm248 = vcmask 130048
    %v250 = vsel %vm248, %v60, 0
    %252 = vmatprep.subr.bf16.mxu0 0
    %253 = vmatpush1.bf16.msra.mxu0 %v247
    %254 = vmatprep.subr.bf16.mxu0 0
    %255 = vmatpush1.bf16.msra.mxu0 0
    %256 = vmatprep.subr.bf16.mxu0 0
    %257 = vmatpush1.bf16.msra.mxu0 0
    %258 = vmatprep.subr.bf16.mxu0 0
    %259 = vmatpush1.bf16.msra.mxu0 0
    %260 = vmatprep.subr.bf16.mxu0 0
    %261 = vmatpush1.bf16.msra.mxu0 0
    %262 = vmatprep.subr.bf16.mxu0 0
    %263 = vmatpush1.bf16.msra.mxu0 0
    %264 = vmatprep.subr.bf16.mxu0 0
    %265 = vmatpush1.bf16.msra.mxu0 0
    %266 = vmatprep.subr.bf16.mxu0 0
    %267 = vmatpush1.bf16.msra.mxu0 0
    %268 = vmatprep.subr.bf16.mxu0 0
    %269 = vmatpush1.bf16.msra.mxu0 0
    %270 = vmatprep.subr.bf16.mxu0 0
    %271 = vmatpush1.bf16.msra.mxu0 0
    %272 = vmatprep.subr.bf16.mxu0 0
    %273 = vmatpush1.bf16.msra.mxu0 0
    %274 = vmatprep.subr.bf16.mxu0 0
    %275 = vmatpush1.bf16.msra.mxu0 0
    %276 = vmatprep.subr.bf16.mxu0 0
    %277 = vmatpush1.bf16.msra.mxu0 0
    %278 = vmatprep.subr.bf16.mxu0 0
    %279 = vmatpush1.bf16.msra.mxu0 0
    %280 = vmatprep.subr.bf16.mxu0 0
    %281 = vmatpush1.bf16.msra.mxu0 0
    %282 = vmatprep.subr.bf16.mxu0 0
    %283 = vmatpush1.bf16.msra.mxu0 0
    %284 = vmatprep.mubr.bf16.mxu0 0
    %285 = vmatmul.mubr.bf16.gmra.mrb[0].mxu0 %v250
    %v286 = vpop.f32.mrb[0].mxu0
    %v287 = vadd.f32 %v245, %v286
    %v288 = vpop.f32.mrb[0].mxu0
    %v289 = vpop.f32.mrb[0].mxu0
    %v290 = vadd.f32 %v246, %v289
    %v291 = vpop.f32.mrb[0].mxu0
    %292 = vdwg.mxu0
    %v293 = vmax.f32 %v287, 0.0
    %v294 = vmax.f32 %v290, 0.0
    %v295 = vpack.c.bf16 %v294, %v293
    %v312 = vunpack.c.l.b16 %v95
    %v313 = vunpack.c.l.b16 %v96
    %v314 = vunpack.c.l.b16 %v97
    %v315 = vunpack.c.l.b16 %v98
    %v316 = vunpack.c.l.b16 %v99
    %v317 = vunpack.c.l.b16 %v100
    %v318 = vunpack.c.l.b16 %v101
    %v319 = vunpack.c.l.b16 %v102
    %v320 = vunpack.c.l.b16 %v103
    %v321 = vunpack.c.l.b16 %v104
    %v322 = vunpack.c.l.b16 %v105
    %v323 = vunpack.c.l.b16 %v106
    %v324 = vunpack.c.l.b16 %v107
    %v325 = vunpack.c.l.b16 %v108
    %v326 = vunpack.c.l.b16 %v109
    %v327 = vunpack.c.l.b16 %v110
    %v328 = vpack.c.b16 %v313, %v312
    %v329 = vpack.c.b16 %v315, %v314
    %v330 = vpack.c.b16 %v317, %v316
    %v331 = vpack.c.b16 %v319, %v318
    %v332 = vpack.c.b16 %v321, %v320
    %v333 = vpack.c.b16 %v323, %v322
    %v334 = vpack.c.b16 %v325, %v324
    %v335 = vpack.c.b16 %v327, %v326
    %344 = vmatprep.subr.bf16.mxu0 0
    %345 = vmatpush1.bf16.msra.mxu0 %v328
    %346 = vmatprep.subr.bf16.mxu0 0
    %347 = vmatpush1.bf16.msra.mxu0 %v329
    %348 = vmatprep.subr.bf16.mxu0 0
    %349 = vmatpush1.bf16.msra.mxu0 %v330
    %350 = vmatprep.subr.bf16.mxu0 0
    %351 = vmatpush1.bf16.msra.mxu0 %v331
    %352 = vmatprep.subr.bf16.mxu0 0
    %353 = vmatpush1.bf16.msra.mxu0 %v332
    %354 = vmatprep.subr.bf16.mxu0 0
    %355 = vmatpush1.bf16.msra.mxu0 %v333
    %356 = vmatprep.subr.bf16.mxu0 0
    %357 = vmatpush1.bf16.msra.mxu0 %v334
    %358 = vmatprep.subr.bf16.mxu0 0
    %359 = vmatpush1.bf16.msra.mxu0 %v335
    %360 = vmatprep.subr.bf16.mxu0 0
    %361 = vmatpush1.bf16.msra.mxu0 0
    %362 = vmatprep.subr.bf16.mxu0 0
    %363 = vmatpush1.bf16.msra.mxu0 0
    %364 = vmatprep.subr.bf16.mxu0 0
    %365 = vmatpush1.bf16.msra.mxu0 0
    %366 = vmatprep.subr.bf16.mxu0 0
    %367 = vmatpush1.bf16.msra.mxu0 0
    %368 = vmatprep.subr.bf16.mxu0 0
    %369 = vmatpush1.bf16.msra.mxu0 0
    %370 = vmatprep.subr.bf16.mxu0 0
    %371 = vmatpush1.bf16.msra.mxu0 0
    %372 = vmatprep.subr.bf16.mxu0 0
    %373 = vmatpush1.bf16.msra.mxu0 0
    %374 = vmatprep.subr.bf16.mxu0 0
    %375 = vmatpush1.bf16.msra.mxu0 0
    %376 = vmatprep.mubr.bf16.mxu0 0
    %377 = vmatmul.mubr.bf16.gmra.mrb[0].mxu0 %v295
    %v378 = vpop.f32.mrb[0].mxu0
    %v379 = vadd.f32 0.0, %v378
    %v380 = vpop.f32.mrb[0].mxu0
    %v381 = vpop.f32.mrb[0].mxu0
    %v382 = vadd.f32 0.0, %v381
    %v383 = vpop.f32.mrb[0].mxu0
    %384 = vdwg.mxu0
    %v385 = vpack.c.bf16 %v382, %v379
    %386 = vmatprep.subr.bf16.mxu0 0
    %387 = vmatpush1.bf16.msra.mxu0 %v385
    %388 = vmatprep.subr.bf16.mxu0 0
    %389 = vmatpush1.bf16.msra.mxu0 0
    %390 = vmatprep.subr.bf16.mxu0 0
    %391 = vmatpush1.bf16.msra.mxu0 0
    %392 = vmatprep.subr.bf16.mxu0 0
    %393 = vmatpush1.bf16.msra.mxu0 0
    %394 = vmatprep.subr.bf16.mxu0 0
    %395 = vmatpush1.bf16.msra.mxu0 0
    %396 = vmatprep.subr.bf16.mxu0 0
    %397 = vmatpush1.bf16.msra.mxu0 0
    %398 = vmatprep.subr.bf16.mxu0 0
    %399 = vmatpush1.bf16.msra.mxu0 0
    %400 = vmatprep.subr.bf16.mxu0 0
    %401 = vmatpush1.bf16.msra.mxu0 0
    %402 = vmatprep.subr.bf16.mxu0 0
    %403 = vmatpush1.bf16.msra.mxu0 0
    %404 = vmatprep.subr.bf16.mxu0 0
    %405 = vmatpush1.bf16.msra.mxu0 0
    %406 = vmatprep.subr.bf16.mxu0 0
    %407 = vmatpush1.bf16.msra.mxu0 0
    %408 = vmatprep.subr.bf16.mxu0 0
    %409 = vmatpush1.bf16.msra.mxu0 0
    %410 = vmatprep.subr.bf16.mxu0 0
    %411 = vmatpush1.bf16.msra.mxu0 0
    %412 = vmatprep.subr.bf16.mxu0 0
    %413 = vmatpush1.bf16.msra.mxu0 0
    %414 = vmatprep.subr.bf16.mxu0 0
    %415 = vmatpush1.bf16.msra.mxu0 0
    %416 = vmatprep.subr.bf16.mxu0 0
    %417 = vmatpush1.bf16.msra.mxu0 0
    %418 = vmatprep.mubr.bf16.mxu0 0
    %419 = vmatmul.mubr.bf16.gmra.mrb[0].mxu0 %v250
    %v420 = vpop.f32.mrb[0].mxu0
    %v421 = vadd.f32 %v245, %v420
    %v422 = vpop.f32.mrb[0].mxu0
    %v423 = vpop.f32.mrb[0].mxu0
    %v424 = vadd.f32 %v246, %v423
    %v425 = vpop.f32.mrb[0].mxu0
    %426 = vdwg.mxu0
    %v427 = vmax.f32 %v421, 0.0
    %v428 = vmax.f32 %v424, 0.0
    %v429 = vpack.c.bf16 %v428, %v427
    %430 = vmatprep.subr.bf16.mxu0 0
    %431 = vmatpush1.bf16.msra.mxu0 %v328
    %432 = vmatprep.subr.bf16.mxu0 0
    %433 = vmatpush1.bf16.msra.mxu0 %v329
    %434 = vmatprep.subr.bf16.mxu0 0
    %435 = vmatpush1.bf16.msra.mxu0 %v330
    %436 = vmatprep.subr.bf16.mxu0 0
    %437 = vmatpush1.bf16.msra.mxu0 %v331
    %438 = vmatprep.subr.bf16.mxu0 0
    %439 = vmatpush1.bf16.msra.mxu0 %v332
    %440 = vmatprep.subr.bf16.mxu0 0
    %441 = vmatpush1.bf16.msra.mxu0 %v333
    %442 = vmatprep.subr.bf16.mxu0 0
    %443 = vmatpush1.bf16.msra.mxu0 %v334
    %444 = vmatprep.subr.bf16.mxu0 0
    %445 = vmatpush1.bf16.msra.mxu0 %v335
    %446 = vmatprep.subr.bf16.mxu0 0
    %447 = vmatpush1.bf16.msra.mxu0 0
    %448 = vmatprep.subr.bf16.mxu0 0
    %449 = vmatpush1.bf16.msra.mxu0 0
    %450 = vmatprep.subr.bf16.mxu0 0
    %451 = vmatpush1.bf16.msra.mxu0 0
    %452 = vmatprep.subr.bf16.mxu0 0
    %453 = vmatpush1.bf16.msra.mxu0 0
    %454 = vmatprep.subr.bf16.mxu0 0
    %455 = vmatpush1.bf16.msra.mxu0 0
    %456 = vmatprep.subr.bf16.mxu0 0
    %457 = vmatpush1.bf16.msra.mxu0 0
    %458 = vmatprep.subr.bf16.mxu0 0
    %459 = vmatpush1.bf16.msra.mxu0 0
    %460 = vmatprep.subr.bf16.mxu0 0
    %461 = vmatpush1.bf16.msra.mxu0 0
    %462 = vmatprep.mubr.bf16.mxu0 0
    %463 = vmatmul.mubr.bf16.gmra.mrb[0].mxu0 %v429
    %v464 = vpop.f32.mrb[0].mxu0
    %v465 = vadd.f32 0.0, %v464
    %v466 = vpop.f32.mrb[0].mxu0
    %v467 = vpop.f32.mrb[0].mxu0
    %v468 = vadd.f32 0.0, %v467
    %v469 = vpop.f32.mrb[0].mxu0
    %470 = vdwg.mxu0
    %v471 = vpack.c.bf16 %v468, %v465
    %472 = vmatprep.subr.bf16.mxu0 0
    %473 = vmatpush1.bf16.msra.mxu0 %v471
    %474 = vmatprep.subr.bf16.mxu0 0
    %475 = vmatpush1.bf16.msra.mxu0 0
    %476 = vmatprep.subr.bf16.mxu0 0
    %477 = vmatpush1.bf16.msra.mxu0 0
    %478 = vmatprep.subr.bf16.mxu0 0
    %479 = vmatpush1.bf16.msra.mxu0 0
    %480 = vmatprep.subr.bf16.mxu0 0
    %481 = vmatpush1.bf16.msra.mxu0 0
    %482 = vmatprep.subr.bf16.mxu0 0
    %483 = vmatpush1.bf16.msra.mxu0 0
    %484 = vmatprep.subr.bf16.mxu0 0
    %485 = vmatpush1.bf16.msra.mxu0 0
    %486 = vmatprep.subr.bf16.mxu0 0
    %487 = vmatpush1.bf16.msra.mxu0 0
    %488 = vmatprep.subr.bf16.mxu0 0
    %489 = vmatpush1.bf16.msra.mxu0 0
    %490 = vmatprep.subr.bf16.mxu0 0
    %491 = vmatpush1.bf16.msra.mxu0 0
    %492 = vmatprep.subr.bf16.mxu0 0
    %493 = vmatpush1.bf16.msra.mxu0 0
    %494 = vmatprep.subr.bf16.mxu0 0
    %495 = vmatpush1.bf16.msra.mxu0 0
    %496 = vmatprep.subr.bf16.mxu0 0
    %497 = vmatpush1.bf16.msra.mxu0 0
    %498 = vmatprep.subr.bf16.mxu0 0
    %499 = vmatpush1.bf16.msra.mxu0 0
    %500 = vmatprep.subr.bf16.mxu0 0
    %501 = vmatpush1.bf16.msra.mxu0 0
    %502 = vmatprep.subr.bf16.mxu0 0
    %503 = vmatpush1.bf16.msra.mxu0 0
    %504 = vmatprep.mubr.bf16.mxu0 0
    %505 = vmatmul.mubr.bf16.gmra.mrb[0].mxu0 %v250
    %v506 = vpop.f32.mrb[0].mxu0
    %v507 = vadd.f32 %v245, %v506
    %v508 = vpop.f32.mrb[0].mxu0
    %v509 = vpop.f32.mrb[0].mxu0
    %v510 = vadd.f32 %v246, %v509
    %v511 = vpop.f32.mrb[0].mxu0
    %512 = vdwg.mxu0
    %v513 = vmax.f32 %v507, 0.0
    %v514 = vmax.f32 %v510, 0.0
    %v515 = vpack.c.bf16 %v514, %v513
    %v532 = vunpack.c.l.b16 %v79
    %v533 = vunpack.c.h.b16 %v79
    %v534 = vunpack.c.l.b16 %v80
    %v535 = vunpack.c.h.b16 %v80
    %v536 = vunpack.c.l.b16 %v81
    %v537 = vunpack.c.h.b16 %v81
    %v538 = vunpack.c.l.b16 %v82
    %v539 = vunpack.c.h.b16 %v82
    %v540 = vunpack.c.l.b16 %v83
    %v541 = vunpack.c.h.b16 %v83
    %v542 = vunpack.c.l.b16 %v84
    %v543 = vunpack.c.h.b16 %v84
    %v544 = vunpack.c.l.b16 %v85
    %v545 = vunpack.c.h.b16 %v85
    %v546 = vunpack.c.l.b16 %v86
    %v547 = vunpack.c.h.b16 %v86
    %v548 = vunpack.c.l.b16 %v87
    %v549 = vunpack.c.h.b16 %v87
    %v550 = vunpack.c.l.b16 %v88
    %v551 = vunpack.c.h.b16 %v88
    %v552 = vunpack.c.l.b16 %v89
    %v553 = vunpack.c.h.b16 %v89
    %v554 = vunpack.c.l.b16 %v90
    %v555 = vunpack.c.h.b16 %v90
    %v556 = vunpack.c.l.b16 %v91
    %v557 = vunpack.c.h.b16 %v91
    %v558 = vunpack.c.l.b16 %v92
    %v559 = vunpack.c.h.b16 %v92
    %v560 = vunpack.c.l.b16 %v93
    %v561 = vunpack.c.h.b16 %v93
    %v562 = vunpack.c.l.b16 %v94
    %v563 = vunpack.c.h.b16 %v94
    %v564 = vpack.c.b16 %v534, %v532
    %v565 = vpack.c.b16 %v535, %v533
    %v566 = vpack.c.b16 %v538, %v536
    %v567 = vpack.c.b16 %v539, %v537
    %v568 = vpack.c.b16 %v542, %v540
    %v569 = vpack.c.b16 %v543, %v541
    %v570 = vpack.c.b16 %v546, %v544
    %v571 = vpack.c.b16 %v547, %v545
    %v572 = vpack.c.b16 %v550, %v548
    %v573 = vpack.c.b16 %v551, %v549
    %v574 = vpack.c.b16 %v554, %v552
    %v575 = vpack.c.b16 %v555, %v553
    %v576 = vpack.c.b16 %v558, %v556
    %v577 = vpack.c.b16 %v559, %v557
    %v578 = vpack.c.b16 %v562, %v560
    %v579 = vpack.c.b16 %v563, %v561
    %596 = vmatprep.subr.bf16.mxu0 %v565
    %597 = vmatpush1.bf16.msra.mxu0 %v564
    %598 = vmatprep.subr.bf16.mxu0 %v567
    %599 = vmatpush1.bf16.msra.mxu0 %v566
    %600 = vmatprep.subr.bf16.mxu0 %v569
    %601 = vmatpush1.bf16.msra.mxu0 %v568
    %602 = vmatprep.subr.bf16.mxu0 %v571
    %603 = vmatpush1.bf16.msra.mxu0 %v570
    %604 = vmatprep.subr.bf16.mxu0 %v573
    %605 = vmatpush1.bf16.msra.mxu0 %v572
    %606 = vmatprep.subr.bf16.mxu0 %v575
    %607 = vmatpush1.bf16.msra.mxu0 %v574
    %608 = vmatprep.subr.bf16.mxu0 %v577
    %609 = vmatpush1.bf16.msra.mxu0 %v576
    %610 = vmatprep.subr.bf16.mxu0 %v579
    %611 = vmatpush1.bf16.msra.mxu0 %v578
    %612 = vmatprep.subr.bf16.mxu0 0
    %613 = vmatpush1.bf16.msra.mxu0 0
    %614 = vmatprep.subr.bf16.mxu0 0
    %615 = vmatpush1.bf16.msra.mxu0 0
    %616 = vmatprep.subr.bf16.mxu0 0
    %617 = vmatpush1.bf16.msra.mxu0 0
    %618 = vmatprep.subr.bf16.mxu0 0
    %619 = vmatpush1.bf16.msra.mxu0 0
    %620 = vmatprep.subr.bf16.mxu0 0
    %621 = vmatpush1.bf16.msra.mxu0 0
    %622 = vmatprep.subr.bf16.mxu0 0
    %623 = vmatpush1.bf16.msra.mxu0 0
    %624 = vmatprep.subr.bf16.mxu0 0
    %625 = vmatpush1.bf16.msra.mxu0 0
    %626 = vmatprep.subr.bf16.mxu0 0
    %627 = vmatpush1.bf16.msra.mxu0 0
    %628 = vmatprep.mubr.bf16.mxu0 0
    %629 = vmatmul.mubr.bf16.gmra.mrb[0].mxu0 %v515
    %v630 = vpop.f32.mrb[0].mxu0
    %v631 = vadd.f32 0.0, %v630
    %v632 = vpop.f32.mrb[0].mxu0
    %v633 = vadd.f32 0.0, %v632
    %v634 = vpop.f32.mrb[0].mxu0
    %v635 = vadd.f32 0.0, %v634
    %v636 = vpop.f32.mrb[0].mxu0
    %v637 = vadd.f32 0.0, %v636
    %638 = vdwg.mxu0
    %v639 = vlaneseq
    %v640 = vshrl.u32 %v639, 7
    %v641 = vsub.s32 1, %v640
    %v642 = vrot.slane %v111, %v641
    %v643 = vadd.f32 %v633, %v642
    %v644 = vadd.f32 %v637, %v642
    %v645 = vpack.c.bf16 %v635, %v631
    %646 = vmatprep.subr.bf16.mxu0 0
    %647 = vmatpush1.bf16.msra.mxu0 %v645
    %648 = vmatprep.subr.bf16.mxu0 0
    %649 = vmatpush1.bf16.msra.mxu0 0
    %650 = vmatprep.subr.bf16.mxu0 0
    %651 = vmatpush1.bf16.msra.mxu0 0
    %652 = vmatprep.subr.bf16.mxu0 0
    %653 = vmatpush1.bf16.msra.mxu0 0
    %654 = vmatprep.subr.bf16.mxu0 0
    %655 = vmatpush1.bf16.msra.mxu0 0
    %656 = vmatprep.subr.bf16.mxu0 0
    %657 = vmatpush1.bf16.msra.mxu0 0
    %658 = vmatprep.subr.bf16.mxu0 0
    %659 = vmatpush1.bf16.msra.mxu0 0
    %660 = vmatprep.subr.bf16.mxu0 0
    %661 = vmatpush1.bf16.msra.mxu0 0
    %662 = vmatprep.subr.bf16.mxu0 0
    %663 = vmatpush1.bf16.msra.mxu0 0
    %664 = vmatprep.subr.bf16.mxu0 0
    %665 = vmatpush1.bf16.msra.mxu0 0
    %666 = vmatprep.subr.bf16.mxu0 0
    %667 = vmatpush1.bf16.msra.mxu0 0
    %668 = vmatprep.subr.bf16.mxu0 0
    %669 = vmatpush1.bf16.msra.mxu0 0
    %670 = vmatprep.subr.bf16.mxu0 0
    %671 = vmatpush1.bf16.msra.mxu0 0
    %672 = vmatprep.subr.bf16.mxu0 0
    %673 = vmatpush1.bf16.msra.mxu0 0
    %674 = vmatprep.subr.bf16.mxu0 0
    %675 = vmatpush1.bf16.msra.mxu0 0
    %676 = vmatprep.subr.bf16.mxu0 0
    %677 = vmatpush1.bf16.msra.mxu0 0
    %678 = vmatprep.mubr.bf16.mxu0 0
    %679 = vmatmul.mubr.bf16.gmra.mrb[0].mxu0 %v250
    %v680 = vpop.f32.mrb[0].mxu0
    %v681 = vadd.f32 %v643, %v680
    %v682 = vpop.f32.mrb[0].mxu0
    %v683 = vpop.f32.mrb[0].mxu0
    %v684 = vadd.f32 %v644, %v683
    %v685 = vpop.f32.mrb[0].mxu0
    %686 = vdwg.mxu0
    %v687 = vmax.f32 %v681, 0.0
    %v688 = vmax.f32 %v684, 0.0
    %v689 = vpack.c.bf16 %v688, %v687
    %v690 = vunpack.c.h.b16 %v95
    %v691 = vunpack.c.h.b16 %v96
    %v692 = vunpack.c.h.b16 %v97
    %v693 = vunpack.c.h.b16 %v98
    %v694 = vunpack.c.h.b16 %v99
    %v695 = vunpack.c.h.b16 %v100
    %v696 = vunpack.c.h.b16 %v101
    %v697 = vunpack.c.h.b16 %v102
    %v698 = vunpack.c.h.b16 %v103
    %v699 = vunpack.c.h.b16 %v104
    %v700 = vunpack.c.h.b16 %v105
    %v701 = vunpack.c.h.b16 %v106
    %v702 = vunpack.c.h.b16 %v107
    %v703 = vunpack.c.h.b16 %v108
    %v704 = vunpack.c.h.b16 %v109
    %v705 = vunpack.c.h.b16 %v110
    %v706 = vpack.c.b16 %v691, %v690
    %v707 = vpack.c.b16 %v693, %v692
    %v708 = vpack.c.b16 %v695, %v694
    %v709 = vpack.c.b16 %v697, %v696
    %v710 = vpack.c.b16 %v699, %v698
    %v711 = vpack.c.b16 %v701, %v700
    %v712 = vpack.c.b16 %v703, %v702
    %v713 = vpack.c.b16 %v705, %v704
    %722 = vmatprep.subr.bf16.mxu0 0
    %723 = vmatpush1.bf16.msra.mxu0 %v706
    %724 = vmatprep.subr.bf16.mxu0 0
    %725 = vmatpush1.bf16.msra.mxu0 %v707
    %726 = vmatprep.subr.bf16.mxu0 0
    %727 = vmatpush1.bf16.msra.mxu0 %v708
    %728 = vmatprep.subr.bf16.mxu0 0
    %729 = vmatpush1.bf16.msra.mxu0 %v709
    %730 = vmatprep.subr.bf16.mxu0 0
    %731 = vmatpush1.bf16.msra.mxu0 %v710
    %732 = vmatprep.subr.bf16.mxu0 0
    %733 = vmatpush1.bf16.msra.mxu0 %v711
    %734 = vmatprep.subr.bf16.mxu0 0
    %735 = vmatpush1.bf16.msra.mxu0 %v712
    %736 = vmatprep.subr.bf16.mxu0 0
    %737 = vmatpush1.bf16.msra.mxu0 %v713
    %738 = vmatprep.subr.bf16.mxu0 0
    %739 = vmatpush1.bf16.msra.mxu0 0
    %740 = vmatprep.subr.bf16.mxu0 0
    %741 = vmatpush1.bf16.msra.mxu0 0
    %742 = vmatprep.subr.bf16.mxu0 0
    %743 = vmatpush1.bf16.msra.mxu0 0
    %744 = vmatprep.subr.bf16.mxu0 0
    %745 = vmatpush1.bf16.msra.mxu0 0
    %746 = vmatprep.subr.bf16.mxu0 0
    %747 = vmatpush1.bf16.msra.mxu0 0
    %748 = vmatprep.subr.bf16.mxu0 0
    %749 = vmatpush1.bf16.msra.mxu0 0
    %750 = vmatprep.subr.bf16.mxu0 0
    %751 = vmatpush1.bf16.msra.mxu0 0
    %752 = vmatprep.subr.bf16.mxu0 0
    %753 = vmatpush1.bf16.msra.mxu0 0
    %754 = vmatprep.mubr.bf16.mxu0 0
    %755 = vmatmul.mubr.bf16.gmra.mrb[0].mxu0 %v689
    %v756 = vpop.f32.mrb[0].mxu0
    %v757 = vadd.f32 0.0, %v756
    %v758 = vpop.f32.mrb[0].mxu0
    %v759 = vpop.f32.mrb[0].mxu0
    %v760 = vadd.f32 0.0, %v759
    %v761 = vpop.f32.mrb[0].mxu0
    %762 = vdwg.mxu0
    %v763 = vpack.c.bf16 %v760, %v757
    %764 = vmatprep.subr.bf16.mxu0 0
    %765 = vmatpush1.bf16.msra.mxu0 %v763
    %766 = vmatprep.subr.bf16.mxu0 0
    %767 = vmatpush1.bf16.msra.mxu0 0
    %768 = vmatprep.subr.bf16.mxu0 0
    %769 = vmatpush1.bf16.msra.mxu0 0
    %770 = vmatprep.subr.bf16.mxu0 0
    %771 = vmatpush1.bf16.msra.mxu0 0
    %772 = vmatprep.subr.bf16.mxu0 0
    %773 = vmatpush1.bf16.msra.mxu0 0
    %774 = vmatprep.subr.bf16.mxu0 0
    %775 = vmatpush1.bf16.msra.mxu0 0
    %776 = vmatprep.subr.bf16.mxu0 0
    %777 = vmatpush1.bf16.msra.mxu0 0
    %778 = vmatprep.subr.bf16.mxu0 0
    %779 = vmatpush1.bf16.msra.mxu0 0
    %780 = vmatprep.subr.bf16.mxu0 0
    %781 = vmatpush1.bf16.msra.mxu0 0
    %782 = vmatprep.subr.bf16.mxu0 0
    %783 = vmatpush1.bf16.msra.mxu0 0
    %784 = vmatprep.subr.bf16.mxu0 0
    %785 = vmatpush1.bf16.msra.mxu0 0
    %786 = vmatprep.subr.bf16.mxu0 0
    %787 = vmatpush1.bf16.msra.mxu0 0
    %788 = vmatprep.subr.bf16.mxu0 0
    %789 = vmatpush1.bf16.msra.mxu0 0
    %790 = vmatprep.subr.bf16.mxu0 0
    %791 = vmatpush1.bf16.msra.mxu0 0
    %792 = vmatprep.subr.bf16.mxu0 0
    %793 = vmatpush1.bf16.msra.mxu0 0
    %794 = vmatprep.subr.bf16.mxu0 0
    %795 = vmatpush1.bf16.msra.mxu0 0
    %796 = vmatprep.mubr.bf16.mxu0 0
    %797 = vmatmul.mubr.bf16.gmra.mrb[0].mxu0 %v250
    %v798 = vpop.f32.mrb[0].mxu0
    %v799 = vadd.f32 %v643, %v798
    %v800 = vpop.f32.mrb[0].mxu0
    %v801 = vpop.f32.mrb[0].mxu0
    %v802 = vadd.f32 %v644, %v801
    %v803 = vpop.f32.mrb[0].mxu0
    %804 = vdwg.mxu0
    %v805 = vmax.f32 %v799, 0.0
    %v806 = vmax.f32 %v802, 0.0
    %v807 = vpack.c.bf16 %v806, %v805
    %808 = vmatprep.subr.bf16.mxu0 0
    %809 = vmatpush1.bf16.msra.mxu0 %v706
    %810 = vmatprep.subr.bf16.mxu0 0
    %811 = vmatpush1.bf16.msra.mxu0 %v707
    %812 = vmatprep.subr.bf16.mxu0 0
    %813 = vmatpush1.bf16.msra.mxu0 %v708
    %814 = vmatprep.subr.bf16.mxu0 0
    %815 = vmatpush1.bf16.msra.mxu0 %v709
    %816 = vmatprep.subr.bf16.mxu0 0
    %817 = vmatpush1.bf16.msra.mxu0 %v710
    %818 = vmatprep.subr.bf16.mxu0 0
    %819 = vmatpush1.bf16.msra.mxu0 %v711
    %820 = vmatprep.subr.bf16.mxu0 0
    %821 = vmatpush1.bf16.msra.mxu0 %v712
    %822 = vmatprep.subr.bf16.mxu0 0
    %823 = vmatpush1.bf16.msra.mxu0 %v713
    %824 = vmatprep.subr.bf16.mxu0 0
    %825 = vmatpush1.bf16.msra.mxu0 0
    %826 = vmatprep.subr.bf16.mxu0 0
    %827 = vmatpush1.bf16.msra.mxu0 0
    %828 = vmatprep.subr.bf16.mxu0 0
    %829 = vmatpush1.bf16.msra.mxu0 0
    %830 = vmatprep.subr.bf16.mxu0 0
    %831 = vmatpush1.bf16.msra.mxu0 0
    %832 = vmatprep.subr.bf16.mxu0 0
    %833 = vmatpush1.bf16.msra.mxu0 0
    %834 = vmatprep.subr.bf16.mxu0 0
    %835 = vmatpush1.bf16.msra.mxu0 0
    %836 = vmatprep.subr.bf16.mxu0 0
    %837 = vmatpush1.bf16.msra.mxu0 0
    %838 = vmatprep.subr.bf16.mxu0 0
    %839 = vmatpush1.bf16.msra.mxu0 0
    %840 = vmatprep.mubr.bf16.mxu0 0
    %841 = vmatmul.mubr.bf16.gmra.mrb[0].mxu0 %v807
    %v842 = vpop.f32.mrb[0].mxu0
    %v843 = vadd.f32 0.0, %v842
    %v844 = vpop.f32.mrb[0].mxu0
    %v845 = vpop.f32.mrb[0].mxu0
    %v846 = vadd.f32 0.0, %v845
    %v847 = vpop.f32.mrb[0].mxu0
    %848 = vdwg.mxu0
    %v849 = vpack.c.bf16 %v846, %v843
    %850 = vmatprep.subr.bf16.mxu0 0
    %851 = vmatpush1.bf16.msra.mxu0 %v849
    %852 = vmatprep.subr.bf16.mxu0 0
    %853 = vmatpush1.bf16.msra.mxu0 0
    %854 = vmatprep.subr.bf16.mxu0 0
    %855 = vmatpush1.bf16.msra.mxu0 0
    %856 = vmatprep.subr.bf16.mxu0 0
    %857 = vmatpush1.bf16.msra.mxu0 0
    %858 = vmatprep.subr.bf16.mxu0 0
    %859 = vmatpush1.bf16.msra.mxu0 0
    %860 = vmatprep.subr.bf16.mxu0 0
    %861 = vmatpush1.bf16.msra.mxu0 0
    %862 = vmatprep.subr.bf16.mxu0 0
    %863 = vmatpush1.bf16.msra.mxu0 0
    %864 = vmatprep.subr.bf16.mxu0 0
    %865 = vmatpush1.bf16.msra.mxu0 0
    %866 = vmatprep.subr.bf16.mxu0 0
    %867 = vmatpush1.bf16.msra.mxu0 0
    %868 = vmatprep.subr.bf16.mxu0 0
    %869 = vmatpush1.bf16.msra.mxu0 0
    %870 = vmatprep.subr.bf16.mxu0 0
    %871 = vmatpush1.bf16.msra.mxu0 0
    %872 = vmatprep.subr.bf16.mxu0 0
    %873 = vmatpush1.bf16.msra.mxu0 0
    %874 = vmatprep.subr.bf16.mxu0 0
    %875 = vmatpush1.bf16.msra.mxu0 0
    %876 = vmatprep.subr.bf16.mxu0 0
    %877 = vmatpush1.bf16.msra.mxu0 0
    %878 = vmatprep.subr.bf16.mxu0 0
    %879 = vmatpush1.bf16.msra.mxu0 0
    %880 = vmatprep.subr.bf16.mxu0 0
    %881 = vmatpush1.bf16.msra.mxu0 0
    %882 = vmatprep.mubr.bf16.mxu0 0
    %883 = vmatmul.mubr.bf16.gmra.mrb[0].mxu0 %v250
    %v884 = vpop.f32.mrb[0].mxu0
    %v885 = vadd.f32 %v643, %v884
    %v886 = vpop.f32.mrb[0].mxu0
    %v887 = vpop.f32.mrb[0].mxu0
    %v888 = vadd.f32 %v644, %v887
    %v889 = vpop.f32.mrb[0].mxu0
    %890 = vdwg.mxu0
    %v891 = vmax.f32 %v885, 0.0
    %v892 = vmax.f32 %v888, 0.0
    %893 = vrot.lane.b32.xlu0 %v891, 4
    %v894 = vpop.permute.xlu0 %893
    %895 = vrot.lane.b32.xlu0 %v892, 4
    %v896 = vpop.permute.xlu0 %895
    %v897 = vadd.f32 %v891, %v894
    %v898 = vadd.f32 %v892, %v896
    %899 = vrot.lane.b32.xlu0 %v891, 124
    %v900 = vpop.permute.xlu0 %899
    %901 = vrot.lane.b32.xlu0 %v892, 124
    %v902 = vpop.permute.xlu0 %901
    %v903 = vadd.f32 %v897, %v900
    %v904 = vadd.f32 %v898, %v902
    %905 = vrot.lane.b32.xlu0 %v891, 8
    %v906 = vpop.permute.xlu0 %905
    %907 = vrot.lane.b32.xlu0 %v892, 8
    %v908 = vpop.permute.xlu0 %907
    %v909 = vadd.f32 %v903, %v906
    %v910 = vadd.f32 %v904, %v908
    %911 = vrot.lane.b32.xlu0 %v891, 120
    %v912 = vpop.permute.xlu0 %911
    %913 = vrot.lane.b32.xlu0 %v892, 120
    %v914 = vpop.permute.xlu0 %913
    %v915 = vadd.f32 %v909, %v912
    %v916 = vadd.f32 %v910, %v914
    %v917 = vmul.f32 %v915, 0.33333334
    %v918 = vmul.f32 %v916, 0.33333334
    %v919 = vlaneseq
    %v920 = vand.u32 %v919, 127
    %vm921 = vcmp.lt.s32.totalorder %v920, 4
    %v922 = vsel %vm921, %v917, -1e+30
    %v923 = vsel %vm921, %v918, -1e+30
    %924 = vmax.xlane.f32.xlu0 %v922
    %v925 = vpop.xlane.xlu0 %924
    %926 = vmax.xlane.f32.xlu0 %v923
    %v927 = vpop.xlane.xlu0 %926
    %v928 = vsub.f32 %v922, %v925
    %v929 = vsub.f32 %v923, %v927
    %v930 = vmul.f32 %v928, 1.442695
    %v931 = vpow.pop %v930
    %v932 = vmul.f32 %v929, 1.442695
    %v933 = vpow.pop %v932
    %v934 = vsel %vm921, %v931, 0.0
    %v935 = vsel %vm921, %v933, 0.0
    %936 = vadd.xlane.f32.xlu0 %v934
    %v937 = vpop.xlane.xlu0 %936
    %938 = vadd.xlane.f32.xlu0 %v935
    %v939 = vpop.xlane.xlu0 %938
    %v940 = vlog2.pop %v937
    %v941 = vmul.f32 %v940, 0.6931472
    %v942 = vlog2.pop %v939
    %v943 = vmul.f32 %v942, 0.6931472
    %v944 = vsub.f32 %v928, %v941
    %v945 = vsub.f32 %v929, %v943
    %946 = vst [vmem:[#allocation9] sm:$0xff] %v944
    %947 = vst [vmem:[#allocation9 + $0x8] sm:$0xff] %v945
    // Predicated region
    $region26: #{tpu_custom_call.1} parent=1 // pred_check
      _
    $region27: #{tpu_custom_call.1} parent=1 // pred_check_branch
      %949 = sbr.rel (0) target = $region29
    $region28: #{tpu_custom_call.1} parent=1 // pred_region
      %s951 = ssub.s32 256, 256
      %952 = vsyncadd [#allocation6], %s951
      %s953 = sshll.u32 [#allocation9], 4
      %s954 = int_to_ptr.vmem [resolvable:$true] %s953
      %959 = dma.vmem_to_hbm [thread:$0]  %s954, 256, %s4, [#allocation6], 128, 128, 8
    $region29: #{tpu_custom_call.1} parent=1 // pred_fallthru
      _
    // Predicated region
    $region30: #{tpu_custom_call.1} parent=1 // pred_check
      _
    $region31: #{tpu_custom_call.1} parent=1 // pred_check_branch
      %961 = sbr.rel (0) target = $region33
    $region32: #{tpu_custom_call.1} parent=1 // pred_region
      %962 = dma.done [#allocation6], 256
    $region33: #{tpu_custom_call.1} parent=1 // pred_fallthru
      _
    %963 = vsyncpa [#allocation5], 1
    %964 = vsyncpa [#allocation8], 1
    %965 = vsyncpa [#allocation6], 1
  %966 = vsyncmov [#allocation3]
  %s967 = vpop.sfrf %966
  %p968 = scmp.eq.s32.totalorder %s967, 0
  %p969 = pneg %p968
  %971 = shalt.err (%p969)

</llo_original>
